<compile_context>
chip_gen: v7x
topology: tpu7x:2x2x1
jax: 0.10.0
libtpu: 0.0.40
codegen_flags: <defaults>
</compile_context>

<pallas_src>
import numpy as np
import jax
import jax.numpy as jnp
from jax import lax
from jax.experimental import pallas as pl
from jax.experimental.pallas import tpu as pltpu

LOGIT_SCALE = float(np.log(1.0 / 0.07))
# Contract on the last (D) dim of both operands: A @ B.T without a physical transpose.
_DOT_DNUMS = (((1,), (1,)), ((), ()))


def _pick_row_tile(n: int) -> int:
    """Row-tile size tN for the N dimension. Full N for small problems; bounded VMEM otherwise."""
    if n <= 1024 or n % 8 != 0:
        return n
    # ~16*tN*N bytes live per step (double-buffered label tile + 2 f32 logits tiles).
    budget = 24 * 1024 * 1024
    t = max(8, min(n, (budget // (16 * n)) // 8 * 8))
    while t > 8 and n % t != 0:
        t -= 8
    return t if n % t == 0 else n


def _make_clip_loss_kernel(num_logits: int):
    inv_scale = 1.0 / (2.0 * float(num_logits))  # fold /N and /2 into one final multiply

    def clip_loss_kernel(img_tile_ref, txt_tile_ref, img_full_ref, txt_full_ref,
                         lbl_ref, out_ref, acc_ref):
        t = pl.program_id(1)
        n_tiles = pl.num_programs(1)

        @pl.when(t == 0)
        def _():
            acc_ref[...] = jnp.zeros_like(acc_ref)

        img_tile = img_tile_ref[0].astype(jnp.float32)   # (tN, D)  rows of this tile
        txt_tile = txt_tile_ref[0].astype(jnp.float32)   # (tN, D)
        img_full = img_full_ref[0].astype(jnp.float32)   # (N, D)   resident across tiles
        txt_full = txt_full_ref[0].astype(jnp.float32)   # (N, D)
        lbl = lbl_ref[0].astype(jnp.float32)             # (tN, N)

        # Both logit directions on the MXU (contract on D); no XLU transpose anywhere.
        logits = LOGIT_SCALE * lax.dot_general(
            img_tile, txt_full, _DOT_DNUMS,
            preferred_element_type=jnp.float32)          # rows of logits_per_image, (tN, N)
        logits_t = LOGIT_SCALE * lax.dot_general(
            txt_tile, img_full, _DOT_DNUMS,
            preferred_element_type=jnp.float32)          # rows of logits_per_text, (tN, N)

        # Label entropy term (only label log), computed once, shared by both directions.
        safe_lbl = jnp.where(lbl > 0, lbl, 1.0)
        ent = jnp.sum(jnp.where(lbl > 0, lbl * jnp.log(safe_lbl), 0.0),
                      keepdims=True)                     # (1, 1)
        rowmass = jnp.sum(lbl, axis=-1, keepdims=True)   # (tN, 1) — don't assume rows sum to 1

        def row_lse(x):
            m = jnp.max(x, axis=-1, keepdims=True)
            return m + jnp.log(jnp.sum(jnp.exp(x - m), axis=-1, keepdims=True))

        lse1 = row_lse(logits)                           # (tN, 1)
        lse2 = row_lse(logits_t)                         # (tN, 1)

        # KL(lbl || softmax(L)) = ent - <lbl, L> + sum_i rowmass_i * LSE_i(L)
        cross1 = jnp.sum(lbl * logits, keepdims=True)    # (1, 1)
        cross2 = jnp.sum(lbl * logits_t, keepdims=True)  # (1, 1)
        kl1 = ent - cross1 + jnp.sum(rowmass * lse1, keepdims=True)
        kl2 = ent - cross2 + jnp.sum(rowmass * lse2, keepdims=True)

        acc_ref[...] += kl1 + kl2

        @pl.when(t == n_tiles - 1)
        def _():
            out_ref[0] = acc_ref[...] * inv_scale        # per-pair loss, written once

    return clip_loss_kernel


def clip_loss(image_features, text_features, labels, *, row_tile=None):
    """image_features, text_features: (P, N, D); labels: (P, N, N). Returns scalar f32."""
    P, N, D = image_features.shape
    assert text_features.shape == (P, N, D)
    assert labels.shape == (P, N, N)

    tn = row_tile if row_tile is not None else _pick_row_tile(N)
    assert N % tn == 0
    n_tiles = N // tn

    kernel = _make_clip_loss_kernel(N)

    per_pair = pl.pallas_call(
        kernel,
        out_shape=jax.ShapeDtypeStruct((P, 1, 1), jnp.float32),
        grid_spec=pltpu.PrefetchScalarGridSpec(
            num_scalar_prefetch=0,
            grid=(P, n_tiles),
            in_specs=[
                pl.BlockSpec((1, tn, D), lambda p, t: (p, t, 0)),  # image rows of this tile
                pl.BlockSpec((1, tn, D), lambda p, t: (p, t, 0)),  # text rows of this tile
                pl.BlockSpec((1, N, D), lambda p, t: (p, 0, 0)),   # full image feats (resident)
                pl.BlockSpec((1, N, D), lambda p, t: (p, 0, 0)),   # full text feats  (resident)
                pl.BlockSpec((1, tn, N), lambda p, t: (p, t, 0)),  # label row tile
            ],
            out_specs=pl.BlockSpec((1, 1, 1), lambda p, t: (p, 0, 0)),
            scratch_shapes=[pltpu.VMEM((1, 1), jnp.float32)],
        ),
        compiler_params=pltpu.CompilerParams(
            # P axis is independent per-pair (megacore / 2-TC shardable);
            # the N-tile axis accumulates into scratch -> "arbitrary".
            dimension_semantics=("parallel", "arbitrary"),
        ),
    )(image_features, text_features, image_features, text_features, labels)

    # total_loss = mean over pairs (matches the PyTorch sum-then-divide).
    return jnp.mean(per_pair[:, 0, 0])


def clip_loss_ref(image_features, text_features, labels):
    """Pure-JAX reference mirroring the PyTorch forward."""
    P, N, _ = image_features.shape
    total = 0.0
    for i in range(P):
        img = image_features[i].astype(jnp.float32)
        txt = text_features[i].astype(jnp.float32)
        lbl = labels[i].astype(jnp.float32)
        logits = LOGIT_SCALE * img @ txt.T
        logits_t = LOGIT_SCALE * txt @ img.T
        pred1 = jax.nn.log_softmax(logits, axis=-1)
        pred2 = jax.nn.log_softmax(logits_t, axis=-1)

        def kl_sum(log_pred):
            safe = jnp.where(lbl > 0, lbl, 1.0)
            return jnp.sum(jnp.where(lbl > 0, lbl * (jnp.log(safe) - log_pred), 0.0))

        loss_a = kl_sum(pred1) / N
        loss_b = kl_sum(pred2) / N
        total = total + (loss_a + loss_b) / 2.0
    return total / P


if __name__ == "__main__":
    key = jax.random.PRNGKey(0)
    k1, k2, k3 = jax.random.split(key, 3)

    P, N, D = 2, 8, 32  # pairs, batch (num logits), feature dim
    image_features = jax.random.normal(k1, (P, N, D), dtype=jnp.float32)
    text_features = jax.random.normal(k2, (P, N, D), dtype=jnp.float32)
    # labels: per-row probability distributions (KL-div targets)
    labels = jax.nn.softmax(jax.random.normal(k3, (P, N, N), dtype=jnp.float32), axis=-1)

    out = jax.block_until_ready(clip_loss(image_features, text_features, labels))
    ref = jax.block_until_ready(clip_loss_ref(image_features, text_features, labels))
    assert np.allclose(np.asarray(out), np.asarray(ref), rtol=1e-4, atol=1e-5), (out, ref)

    print("KERNEL_OK")
</pallas_src>

<mosaic_0001>
module attributes {stable_mosaic.version = 11 : i64} {
  func.func @clip_loss_kernel(%arg0: i32, %arg1: i32, %arg2: memref<1x8x32xf32, #tpu.memory_space<vmem>>, %arg3: memref<1x8x32xf32, #tpu.memory_space<vmem>>, %arg4: memref<1x8x32xf32, #tpu.memory_space<vmem>>, %arg5: memref<1x8x32xf32, #tpu.memory_space<vmem>>, %arg6: memref<1x8x8xf32, #tpu.memory_space<vmem>>, %arg7: memref<1x1x1xf32, #tpu.memory_space<vmem>>, %arg8: memref<1x1xf32, #tpu.memory_space<vmem>>) attributes {dimension_semantics = [#tpu.dimension_semantics<parallel>, #tpu.dimension_semantics<arbitrary>], iteration_bounds = array<i64: 2, 1>, scalar_prefetch = 0 : i64, scratch_operands = 1 : i64, tpu.core_type = #tpu.core_type<tc>, window_params = [{transform_indices = @transform_0, window_bounds = array<i64: 1, 8, 32>}, {transform_indices = @transform_1, window_bounds = array<i64: 1, 8, 32>}, {transform_indices = @transform_2, window_bounds = array<i64: 1, 8, 32>}, {transform_indices = @transform_3, window_bounds = array<i64: 1, 8, 32>}, {transform_indices = @transform_4, window_bounds = array<i64: 1, 8, 8>}, {transform_indices = @transform_5, window_bounds = array<i64: 1, 1, 1>}]} {
    %c0_i32 = arith.constant 0 : i32
    %0 = arith.cmpi eq, %arg1, %c0_i32 : i32
    %1 = arith.extui %0 : i1 to i32
    %c0_i32_0 = arith.constant 0 : i32
    %2 = arith.cmpi ne, %1, %c0_i32_0 : i32
    scf.if %2 {
      %cst_38 = arith.constant 0.000000e+00 : f32
      %89 = vector.broadcast %cst_38 : f32 to vector<1x1xf32>
      %c0_39 = arith.constant 0 : index
      %c0_40 = arith.constant 0 : index
      %90 = vector.load %arg8[%c0_39, %c0_40] : memref<1x1xf32, #tpu.memory_space<vmem>>, vector<1x1xf32>
      tpu.vector_store %arg8[%c0_39, %c0_40], %89 {strides = array<i32>} : memref<1x1xf32, #tpu.memory_space<vmem>>, vector<1x1xf32>,
    } else {
    }
    %c0 = arith.constant 0 : index
    %c0_1 = arith.constant 0 : index
    %c0_2 = arith.constant 0 : index
    %3 = vector.load %arg2[%c0, %c0_1, %c0_2] : memref<1x8x32xf32, #tpu.memory_space<vmem>>, vector<1x8x32xf32>
    %4 = vector.shape_cast %3 : vector<1x8x32xf32> to vector<8x32xf32>
    %c0_3 = arith.constant 0 : index
    %c0_4 = arith.constant 0 : index
    %c0_5 = arith.constant 0 : index
    %5 = vector.load %arg3[%c0_3, %c0_4, %c0_5] : memref<1x8x32xf32, #tpu.memory_space<vmem>>, vector<1x8x32xf32>
    %6 = vector.shape_cast %5 : vector<1x8x32xf32> to vector<8x32xf32>
    %c0_6 = arith.constant 0 : index
    %c0_7 = arith.constant 0 : index
    %c0_8 = arith.constant 0 : index
    %7 = vector.load %arg4[%c0_6, %c0_7, %c0_8] : memref<1x8x32xf32, #tpu.memory_space<vmem>>, vector<1x8x32xf32>
    %8 = vector.shape_cast %7 : vector<1x8x32xf32> to vector<8x32xf32>
    %c0_9 = arith.constant 0 : index
    %c0_10 = arith.constant 0 : index
    %c0_11 = arith.constant 0 : index
    %9 = vector.load %arg5[%c0_9, %c0_10, %c0_11] : memref<1x8x32xf32, #tpu.memory_space<vmem>>, vector<1x8x32xf32>
    %10 = vector.shape_cast %9 : vector<1x8x32xf32> to vector<8x32xf32>
    %c0_12 = arith.constant 0 : index
    %c0_13 = arith.constant 0 : index
    %c0_14 = arith.constant 0 : index
    %11 = vector.load %arg6[%c0_12, %c0_13, %c0_14] : memref<1x8x8xf32, #tpu.memory_space<vmem>>, vector<1x8x8xf32>
    %12 = vector.shape_cast %11 : vector<1x8x8xf32> to vector<8x8xf32>
    %cst = arith.constant dense<0.000000e+00> : vector<8x8xf32>
    %13 = tpu.matmul %4, %10, %cst {dimension_numbers = #tpu.dot_dimension_numbers<[1], [1], [0], [0], [0, 0, 1, 0], [], []>} : vector<8x32xf32>, vector<8x32xf32>, vector<8x8xf32> -> vector<8x8xf32>
    %cst_15 = arith.constant 2.659260e+00 : f32
    %14 = vector.broadcast %cst_15 : f32 to vector<8x8xf32>
    %15 = arith.mulf %14, %13 : vector<8x8xf32>
    %cst_16 = arith.constant dense<0.000000e+00> : vector<8x8xf32>
    %16 = tpu.matmul %6, %8, %cst_16 {dimension_numbers = #tpu.dot_dimension_numbers<[1], [1], [0], [0], [0, 0, 1, 0], [], []>} : vector<8x32xf32>, vector<8x32xf32>, vector<8x8xf32> -> vector<8x8xf32>
    %cst_17 = arith.constant 2.659260e+00 : f32
    %17 = vector.broadcast %cst_17 : f32 to vector<8x8xf32>
    %18 = arith.mulf %17, %16 : vector<8x8xf32>
    %cst_18 = arith.constant 0.000000e+00 : f32
    %19 = vector.broadcast %cst_18 : f32 to vector<8x8xf32>
    %20 = arith.cmpf ogt, %12, %19 : vector<8x8xf32>
    %cst_19 = arith.constant 1.000000e+00 : f32
    %21 = vector.broadcast %cst_19 : f32 to vector<8x8xf32>
    %22 = arith.select %20, %12, %21 : vector<8x8xi1>, vector<8x8xf32>
    %cst_20 = arith.constant 0.000000e+00 : f32
    %23 = vector.broadcast %cst_20 : f32 to vector<8x8xf32>
    %24 = arith.cmpf ogt, %12, %23 : vector<8x8xf32>
    %25 = math.log %22 : vector<8x8xf32>
    %26 = arith.mulf %12, %25 : vector<8x8xf32>
    %cst_21 = arith.constant 0.000000e+00 : f32
    %27 = vector.broadcast %cst_21 : f32 to vector<8x8xf32>
    %28 = arith.select %24, %26, %27 : vector<8x8xi1>, vector<8x8xf32>
    %29 = vector.shape_cast %28 : vector<8x8xf32> to vector<1x8x8xf32>
    %cst_22 = arith.constant dense<0.000000e+00> : vector<1xf32>
    %30 = vector.multi_reduction <add>, %29, %cst_22 [1, 2] : vector<1x8x8xf32> to vector<1xf32>
    %31 = vector.shape_cast %30 : vector<1xf32> to vector<1x1x1xf32>
    %32 = vector.extract %31[0, 0, 0] : f32 from vector<1x1x1xf32>
    %33 = vector.broadcast %32 : f32 to vector<1x1xf32>
    %cst_23 = arith.constant dense<0.000000e+00> : vector<8xf32>
    %34 = vector.multi_reduction <add>, %12, %cst_23 [1] : vector<8x8xf32> to vector<8xf32>
    %35 = vector.shape_cast %34 : vector<8xf32> to vector<8x1xf32>
    %cst_24 = arith.constant dense<0xFF800000> : vector<8xf32>
    %36 = vector.multi_reduction <maximumf>, %15, %cst_24 [1] : vector<8x8xf32> to vector<8xf32>
    %37 = vector.shape_cast %36 : vector<8xf32> to vector<8x1xf32>
    %38 = vector.broadcast %37 : vector<8x1xf32> to vector<8x8xf32>
    %39 = arith.subf %15, %38 : vector<8x8xf32>
    %40 = math.exp %39 : vector<8x8xf32>
    %cst_25 = arith.constant dense<0.000000e+00> : vector<8xf32>
    %41 = vector.multi_reduction <add>, %40, %cst_25 [1] : vector<8x8xf32> to vector<8xf32>
    %42 = vector.shape_cast %41 : vector<8xf32> to vector<8x1xf32>
    %43 = math.log %42 : vector<8x1xf32>
    %44 = arith.addf %37, %43 : vector<8x1xf32>
    %cst_26 = arith.constant dense<0xFF800000> : vector<8xf32>
    %45 = vector.multi_reduction <maximumf>, %18, %cst_26 [1] : vector<8x8xf32> to vector<8xf32>
    %46 = vector.shape_cast %45 : vector<8xf32> to vector<8x1xf32>
    %47 = vector.broadcast %46 : vector<8x1xf32> to vector<8x8xf32>
    %48 = arith.subf %18, %47 : vector<8x8xf32>
    %49 = math.exp %48 : vector<8x8xf32>
    %cst_27 = arith.constant dense<0.000000e+00> : vector<8xf32>
    %50 = vector.multi_reduction <add>, %49, %cst_27 [1] : vector<8x8xf32> to vector<8xf32>
    %51 = vector.shape_cast %50 : vector<8xf32> to vector<8x1xf32>
    %52 = math.log %51 : vector<8x1xf32>
    %53 = arith.addf %46, %52 : vector<8x1xf32>
    %54 = arith.mulf %12, %15 : vector<8x8xf32>
    %55 = vector.shape_cast %54 : vector<8x8xf32> to vector<1x8x8xf32>
    %cst_28 = arith.constant dense<0.000000e+00> : vector<1xf32>
    %56 = vector.multi_reduction <add>, %55, %cst_28 [1, 2] : vector<1x8x8xf32> to vector<1xf32>
    %57 = vector.shape_cast %56 : vector<1xf32> to vector<1x1x1xf32>
    %58 = vector.extract %57[0, 0, 0] : f32 from vector<1x1x1xf32>
    %59 = vector.broadcast %58 : f32 to vector<1x1xf32>
    %60 = arith.mulf %12, %18 : vector<8x8xf32>
    %61 = vector.shape_cast %60 : vector<8x8xf32> to vector<1x8x8xf32>
    %cst_29 = arith.constant dense<0.000000e+00> : vector<1xf32>
    %62 = vector.multi_reduction <add>, %61, %cst_29 [1, 2] : vector<1x8x8xf32> to vector<1xf32>
    %63 = vector.shape_cast %62 : vector<1xf32> to vector<1x1x1xf32>
    %64 = vector.extract %63[0, 0, 0] : f32 from vector<1x1x1xf32>
    %65 = vector.broadcast %64 : f32 to vector<1x1xf32>
    %66 = arith.subf %33, %59 : vector<1x1xf32>
    %67 = arith.mulf %35, %44 : vector<8x1xf32>
    %68 = vector.shape_cast %67 : vector<8x1xf32> to vector<1x8x1xf32>
    %cst_30 = arith.constant dense<0.000000e+00> : vector<1xf32>
    %69 = vector.multi_reduction <add>, %68, %cst_30 [1, 2] : vector<1x8x1xf32> to vector<1xf32>
    %70 = vector.shape_cast %69 : vector<1xf32> to vector<1x1x1xf32>
    %71 = vector.extract %70[0, 0, 0] : f32 from vector<1x1x1xf32>
    %72 = vector.broadcast %71 : f32 to vector<1x1xf32>
    %73 = arith.addf %66, %72 : vector<1x1xf32>
    %74 = arith.subf %33, %65 : vector<1x1xf32>
    %75 = arith.mulf %35, %53 : vector<8x1xf32>
    %76 = vector.shape_cast %75 : vector<8x1xf32> to vector<1x8x1xf32>
    %cst_31 = arith.constant dense<0.000000e+00> : vector<1xf32>
    %77 = vector.multi_reduction <add>, %76, %cst_31 [1, 2] : vector<1x8x1xf32> to vector<1xf32>
    %78 = vector.shape_cast %77 : vector<1xf32> to vector<1x1x1xf32>
    %79 = vector.extract %78[0, 0, 0] : f32 from vector<1x1x1xf32>
    %80 = vector.broadcast %79 : f32 to vector<1x1xf32>
    %81 = arith.addf %74, %80 : vector<1x1xf32>
    %c0_32 = arith.constant 0 : index
    %c0_33 = arith.constant 0 : index
    %82 = vector.load %arg8[%c0_32, %c0_33] : memref<1x1xf32, #tpu.memory_space<vmem>>, vector<1x1xf32>
    %83 = arith.addf %73, %81 : vector<1x1xf32>
    %84 = arith.addf %82, %83 : vector<1x1xf32>
    %c0_34 = arith.constant 0 : index
    %c0_35 = arith.constant 0 : index
    %85 = vector.load %arg8[%c0_34, %c0_35] : memref<1x1xf32, #tpu.memory_space<vmem>>, vector<1x1xf32>
    tpu.vector_store %arg8[%c0_34, %c0_35], %84 {strides = array<i32>} : memref<1x1xf32, #tpu.memory_space<vmem>>, vector<1x1xf32>,
    %c0_i32_36 = arith.constant 0 : i32
    %86 = arith.cmpi eq, %arg1, %c0_i32_36 : i32
    %87 = arith.extui %86 : i1 to i32
    %c0_i32_37 = arith.constant 0 : i32
    %88 = arith.cmpi ne, %87, %c0_i32_37 : i32
    scf.if %88 {
      %c0_38 = arith.constant 0 : index
      %c0_39 = arith.constant 0 : index
      %89 = vector.load %arg8[%c0_38, %c0_39] : memref<1x1xf32, #tpu.memory_space<vmem>>, vector<1x1xf32>
      %cst_40 = arith.constant 6.250000e-02 : f32
      %90 = vector.broadcast %cst_40 : f32 to vector<1x1xf32>
      %91 = arith.mulf %89, %90 : vector<1x1xf32>
      %c0_41 = arith.constant 0 : index
      %c0_42 = arith.constant 0 : index
      %c0_43 = arith.constant 0 : index
      %92 = vector.load %arg7[%c0_41, %c0_42, %c0_43] : memref<1x1x1xf32, #tpu.memory_space<vmem>>, vector<1x1x1xf32>
      %93 = vector.shape_cast %92 : vector<1x1x1xf32> to vector<1x1xf32>
      %94 = vector.shape_cast %91 : vector<1x1xf32> to vector<1x1x1xf32>
      tpu.vector_store %arg7[%c0_41, %c0_42, %c0_43], %94 {strides = array<i32>} : memref<1x1x1xf32, #tpu.memory_space<vmem>>, vector<1x1x1xf32>,
    } else {
    }
    return
  }
  func.func @transform_0(%arg0: i32, %arg1: i32) -> (i32, i32, i32) {
    %c0_i32 = arith.constant 0 : i32
    %c0_i32_0 = arith.constant 0 : i32
    return %arg0, %arg1, %c0_i32 : i32, i32, i32
  }
  func.func @transform_1(%arg0: i32, %arg1: i32) -> (i32, i32, i32) {
    %c0_i32 = arith.constant 0 : i32
    %c0_i32_0 = arith.constant 0 : i32
    return %arg0, %arg1, %c0_i32 : i32, i32, i32
  }
  func.func @transform_2(%arg0: i32, %arg1: i32) -> (i32, i32, i32) {
    %c0_i32 = arith.constant 0 : i32
    %c0_i32_0 = arith.constant 0 : i32
    %c0_i32_1 = arith.constant 0 : i32
    return %arg0, %c0_i32, %c0_i32_0 : i32, i32, i32
  }
  func.func @transform_3(%arg0: i32, %arg1: i32) -> (i32, i32, i32) {
    %c0_i32 = arith.constant 0 : i32
    %c0_i32_0 = arith.constant 0 : i32
    %c0_i32_1 = arith.constant 0 : i32
    return %arg0, %c0_i32, %c0_i32_0 : i32, i32, i32
  }
  func.func @transform_4(%arg0: i32, %arg1: i32) -> (i32, i32, i32) {
    %c0_i32 = arith.constant 0 : i32
    %c0_i32_0 = arith.constant 0 : i32
    return %arg0, %arg1, %c0_i32 : i32, i32, i32
  }
  func.func @transform_5(%arg0: i32, %arg1: i32) -> (i32, i32, i32) {
    %c0_i32 = arith.constant 0 : i32
    %c0_i32_0 = arith.constant 0 : i32
    %c0_i32_1 = arith.constant 0 : i32
    return %arg0, %c0_i32, %c0_i32_0 : i32, i32, i32
  }
}

</mosaic_0001>

<llo_original>
// kernel: tpu_custom_call.1
$region0: #{tpu_custom_call.1}
  #allocation0 [shape = 'u32[]', space=smem, size = 0x4, offset = 0x4, fixed_abs, tag = 'smem constant byte address 0x4 - core index']
  #allocation1 [shape = 'u32[144,128]{1,0:T(1,128)}', space=vmem, size = 0x12000, scoped, tag = 'internal scratch']
  #allocation2 [shape = 'f32[1,1]{1,0:T(1,128)}', space=vmem, size = 0x200, scoped, tag = 'scratch operand']
  %s0 = inlined_call_operand.hbm [shape: f32[2,8,32], index: 0, kind: input, shape index: {}]
  %s1 = inlined_call_operand.hbm [shape: f32[2,8,32], index: 1, kind: input, shape index: {}]
  %s2 = inlined_call_operand.hbm [shape: f32[2,8,32], index: 2, kind: input, shape index: {}]
  %s3 = inlined_call_operand.hbm [shape: f32[2,8,32], index: 3, kind: input, shape index: {}]
  %s4 = inlined_call_operand.hbm [shape: f32[2,8,8], index: 4, kind: input, shape index: {}]
  %s5 = inlined_call_operand.vmem [shape: f32[2,1,1], index: 5, kind: output, shape index: {}]
  %s6 = sld [smem:[#allocation0]]
  $region81: #{tpu_custom_call.1} parent=0
    _
  %s8 = ssub.s32 1, %s6
  %s9 = scalar_select 0, %s8, %s6
  $region1: #{tpu_custom_call.1} parent=0
    #allocation3 [shape = 'u8[8192]{0}', space=vmem, size = 0x2000, scoped, tag = 'input window, operand 0']
    #allocation4 [shape = 's32[2]{0}', space=sflag, size = 0x8, scoped, tag = 'scoped memory for tpu_custom_call.1']
    #allocation5 [shape = 'u8[8192]{0}', space=vmem, size = 0x2000, scoped, tag = 'input window, operand 1']
    #allocation6 [shape = 's32[2]{0}', space=sflag, size = 0x8, scoped, tag = 'scoped memory for tpu_custom_call.1']
    #allocation7 [shape = 'u8[8192]{0}', space=vmem, size = 0x2000, scoped, tag = 'input window, operand 2']
    #allocation8 [shape = 'u8[8192]{0}', space=vmem, size = 0x2000, scoped, tag = 'input window, operand 3']
    #allocation9 [shape = 's32[2]{0}', space=sflag, size = 0x8, scoped, tag = 'scoped memory for tpu_custom_call.1']
    #allocation10 [shape = 'u8[8192]{0}', space=vmem, size = 0x2000, scoped, tag = 'input window, operand 4']
    %10 = vsyncpa [#allocation4], 0
    %s11 = scalar_lea.sflag [#allocation4], 1
    %12 = vsyncpa %s11, 0
    %13 = vsyncpa [#allocation6], 0
    %s14 = scalar_lea.sflag [#allocation6], 1
    %15 = vsyncpa %s14, 0
    %16 = vsyncpa [#allocation9], 0
    %s17 = scalar_lea.sflag [#allocation9], 1
    %18 = vsyncpa %s17, 0
    loop: start=0, step=1, limit=4
    $region2: #{tpu_custom_call.1} parent=1 // loop_pre_header
      _
    $region3: #{tpu_custom_call.1} parent=1 // loop_header
      %s20 = sphi 0, %s24
      %p21 = scmp.ge.s32.totalorder %s20, 4
      %s27 = sphi 0, %s39
      %s28 = sphi 0, %s35
      %s29 = sphi 0, %s27
      %s30 = sphi 0, %s28
      %s31 = sphi 0, %s29
      %s32 = sphi 0, %s30
      %s44 = sphi 0, %s46
      %s47 = sphi 0, %s44
      %s48 = sphi 0, %s47
      %s64 = sphi 0, %s48
      %s72 = sphi 0, %s74
      %s75 = sphi 0, %s72
      %s76 = sphi 0, %s75
      %s92 = sphi 0, %s76
      %s98 = sphi 0, %s100
      %s101 = sphi 0, %s98
      %s102 = sphi 0, %s101
      %s118 = sphi 0, %s102
      %s124 = sphi 0, %s126
      %s127 = sphi 0, %s124
      %s128 = sphi 0, %s127
      %s144 = sphi 0, %s128
      %s152 = sphi 0, %s154
      %s155 = sphi 0, %s152
      %s156 = sphi 0, %s155
      %s172 = sphi 0, %s156
      %s178 = sphi 0, %s180
      %s181 = sphi 0, %s178
      %s182 = sphi 0, %s181
      %s198 = sphi 0, %s182
    $region4: #{tpu_custom_call.1} parent=1 // loop_header_branch
      %23 = sbr.rel (%p21) target = $region8
    $region5: #{tpu_custom_call.1} parent=1 // loop_body
      %s25 = ssub.s32 %s20, 1
      %s26 = ssub.s32 %s20, 2
      %s33 = sadd.s32 1, %s28
      %p34 = scmp.ge.s32.totalorder %s33, 1
      %s35 = scalar_select %p34, 0, %s33
      %s36 = sadd.s32 1, %s27
      %s37 = scalar_select %p34, %s36, %s27
      %p38 = scmp.ge.s32.totalorder %s37, 2
      %s39 = scalar_select %p38, 0, %s37
      %s40 = ssub.s32 %s27, %s39
      %s41 = ssub.s32 %s28, %s35
      %s42 = sor.u32 %s40, %s41
      %p43 = scmp.eq.s32.totalorder %s42, 0
      %s45 = sadd.s32 %s44, 1
      %s46 = scalar_select %p43, %s44, %s45
      %p49 = pneg %p43
      %p50 = scmp.eq.s32.totalorder %s20, 1
      %p51 = por %p49, %p50
      %p52 = scmp.ne.s32.totalorder %s44, %s47
      %p53 = scmp.eq.s32.totalorder %s20, 0
      %p54 = por %p52, %p53
      %p55 = scmp.ne.s32.totalorder %s44, %s47
      %p56 = scmp.eq.s32.totalorder %s25, 1
      %p57 = por %p55, %p56
      %p58 = scmp.ne.s32.totalorder %s47, %s48
      %p59 = scmp.eq.s32.totalorder %s25, 0
      %p60 = por %p58, %p59
      %p61 = scmp.ne.s32.totalorder %s47, %s48
      %p62 = scmp.eq.s32.totalorder %s26, 1
      %p63 = por %p61, %p62
      %p65 = scmp.ne.s32.totalorder %s48, %s64
      %p66 = scmp.eq.s32.totalorder %s26, 0
      %p67 = por %p65, %p66
      %s68 = ssub.s32 %s27, %s39
      %s69 = ssub.s32 %s28, %s35
      %s70 = sor.u32 %s68, %s69
      %p71 = scmp.eq.s32.totalorder %s70, 0
      %s73 = sadd.s32 %s72, 1
      %s74 = scalar_select %p71, %s72, %s73
      %p77 = pneg %p71
      %p78 = scmp.eq.s32.totalorder %s20, 1
      %p79 = por %p77, %p78
      %p80 = scmp.ne.s32.totalorder %s72, %s75
      %p81 = scmp.eq.s32.totalorder %s20, 0
      %p82 = por %p80, %p81
      %p83 = scmp.ne.s32.totalorder %s72, %s75
      %p84 = scmp.eq.s32.totalorder %s25, 1
      %p85 = por %p83, %p84
      %p86 = scmp.ne.s32.totalorder %s75, %s76
      %p87 = scmp.eq.s32.totalorder %s25, 0
      %p88 = por %p86, %p87
      %p89 = scmp.ne.s32.totalorder %s75, %s76
      %p90 = scmp.eq.s32.totalorder %s26, 1
      %p91 = por %p89, %p90
      %p93 = scmp.ne.s32.totalorder %s76, %s92
      %p94 = scmp.eq.s32.totalorder %s26, 0
      %p95 = por %p93, %p94
      %s96 = ssub.s32 %s27, %s39
      %p97 = scmp.eq.s32.totalorder %s96, 0
      %s99 = sadd.s32 %s98, 1
      %s100 = scalar_select %p97, %s98, %s99
      %p103 = pneg %p97
      %p104 = scmp.eq.s32.totalorder %s20, 1
      %p105 = por %p103, %p104
      %p106 = scmp.ne.s32.totalorder %s98, %s101
      %p107 = scmp.eq.s32.totalorder %s20, 0
      %p108 = por %p106, %p107
      %p109 = scmp.ne.s32.totalorder %s98, %s101
      %p110 = scmp.eq.s32.totalorder %s25, 1
      %p111 = por %p109, %p110
      %p112 = scmp.ne.s32.totalorder %s101, %s102
      %p113 = scmp.eq.s32.totalorder %s25, 0
      %p114 = por %p112, %p113
      %p115 = scmp.ne.s32.totalorder %s101, %s102
      %p116 = scmp.eq.s32.totalorder %s26, 1
      %p117 = por %p115, %p116
      %p119 = scmp.ne.s32.totalorder %s102, %s118
      %p120 = scmp.eq.s32.totalorder %s26, 0
      %p121 = por %p119, %p120
      %s122 = ssub.s32 %s27, %s39
      %p123 = scmp.eq.s32.totalorder %s122, 0
      %s125 = sadd.s32 %s124, 1
      %s126 = scalar_select %p123, %s124, %s125
      %p129 = pneg %p123
      %p130 = scmp.eq.s32.totalorder %s20, 1
      %p131 = por %p129, %p130
      %p132 = scmp.ne.s32.totalorder %s124, %s127
      %p133 = scmp.eq.s32.totalorder %s20, 0
      %p134 = por %p132, %p133
      %p135 = scmp.ne.s32.totalorder %s124, %s127
      %p136 = scmp.eq.s32.totalorder %s25, 1
      %p137 = por %p135, %p136
      %p138 = scmp.ne.s32.totalorder %s127, %s128
      %p139 = scmp.eq.s32.totalorder %s25, 0
      %p140 = por %p138, %p139
      %p141 = scmp.ne.s32.totalorder %s127, %s128
      %p142 = scmp.eq.s32.totalorder %s26, 1
      %p143 = por %p141, %p142
      %p145 = scmp.ne.s32.totalorder %s128, %s144
      %p146 = scmp.eq.s32.totalorder %s26, 0
      %p147 = por %p145, %p146
      %s148 = ssub.s32 %s27, %s39
      %s149 = ssub.s32 %s28, %s35
      %s150 = sor.u32 %s148, %s149
      %p151 = scmp.eq.s32.totalorder %s150, 0
      %s153 = sadd.s32 %s152, 1
      %s154 = scalar_select %p151, %s152, %s153
      %p157 = pneg %p151
      %p158 = scmp.eq.s32.totalorder %s20, 1
      %p159 = por %p157, %p158
      %p160 = scmp.ne.s32.totalorder %s152, %s155
      %p161 = scmp.eq.s32.totalorder %s20, 0
      %p162 = por %p160, %p161
      %p163 = scmp.ne.s32.totalorder %s152, %s155
      %p164 = scmp.eq.s32.totalorder %s25, 1
      %p165 = por %p163, %p164
      %p166 = scmp.ne.s32.totalorder %s155, %s156
      %p167 = scmp.eq.s32.totalorder %s25, 0
      %p168 = por %p166, %p167
      %p169 = scmp.ne.s32.totalorder %s155, %s156
      %p170 = scmp.eq.s32.totalorder %s26, 1
      %p171 = por %p169, %p170
      %p173 = scmp.ne.s32.totalorder %s156, %s172
      %p174 = scmp.eq.s32.totalorder %s26, 0
      %p175 = por %p173, %p174
      %s176 = ssub.s32 %s27, %s39
      %p177 = scmp.eq.s32.totalorder %s176, 0
      %s179 = sadd.s32 %s178, 1
      %s180 = scalar_select %p177, %s178, %s179
      %p183 = pneg %p177
      %p184 = scmp.eq.s32.totalorder %s20, 1
      %p185 = por %p183, %p184
      %p186 = scmp.ne.s32.totalorder %s178, %s181
      %p187 = scmp.eq.s32.totalorder %s20, 0
      %p188 = por %p186, %p187
      %p189 = scmp.ne.s32.totalorder %s178, %s181
      %p190 = scmp.eq.s32.totalorder %s25, 1
      %p191 = por %p189, %p190
      %p192 = scmp.ne.s32.totalorder %s181, %s182
      %p193 = scmp.eq.s32.totalorder %s25, 0
      %p194 = por %p192, %p193
      %p195 = scmp.ne.s32.totalorder %s181, %s182
      %p196 = scmp.eq.s32.totalorder %s26, 1
      %p197 = por %p195, %p196
      %p199 = scmp.ne.s32.totalorder %s182, %s198
      %p200 = scmp.eq.s32.totalorder %s26, 0
      %p201 = por %p199, %p200
      %p202 = scmp.le.s32.totalorder 1, %s20
      %p203 = scmp.lt.s32.totalorder %s20, 3
      %p204 = pnand %p202, %p203
      %p205 = pneg %p204
      // Predicated region
      $region9: #{tpu_custom_call.1} parent=5 // pred_check
        _
      $region10: #{tpu_custom_call.1} parent=5 // pred_check_branch
        %207 = sbr.rel (%p204) target = $region12
      $region11: #{tpu_custom_call.1} parent=5 // pred_region
        %s208 = ssub.s32 %s20, 1
      $region12: #{tpu_custom_call.1} parent=5 // pred_fallthru
        _
      %p209 = scmp.lt.s32.totalorder %s20, 2
      // Predicated region
      $region13: #{tpu_custom_call.1} parent=5 // pred_check
        %p210 = pneg %p209
      $region14: #{tpu_custom_call.1} parent=5 // pred_check_branch
        %212 = sbr.rel (%p210) target = $region16
      $region15: #{tpu_custom_call.1} parent=5 // pred_region
        // Predicated region
        $region17: #{tpu_custom_call.1} parent=15 // pred_check
          %p213 = pneg %p54
        $region18: #{tpu_custom_call.1} parent=15 // pred_check_branch
          %215 = sbr.rel (%p213) target = $region20
        $region19: #{tpu_custom_call.1} parent=15 // pred_region
          %s216 = sand.u32 %s44, 1
          %s217 = scalar_lea.sflag [#allocation4], %s216
          %s218 = sand.u32 %s44, 1
          %s219 = smul.addr %s218, 8
          %s220 = scalar_lea.vmem [#allocation3], %s219
          %s222 = ssub.s32 128, 128
          %223 = vsyncadd %s217, %s222
          %s224 = sadd.s32 %s28, %s27
          %s225 = smul.addr %s224, 128
          %s226 = scalar_lea.hbm %s0, %s225
          %s228 = sshll.u32 %s220, 4
          %s229 = int_to_ptr.vmem [resolvable:$true] %s228
          %231 = dma.hbm_to_vmem [thread:$0]  %s226, 128, %s229, %s217
        $region20: #{tpu_custom_call.1} parent=15 // pred_fallthru
          _
        // Predicated region
        $region21: #{tpu_custom_call.1} parent=15 // pred_check
          %p232 = pneg %p82
        $region22: #{tpu_custom_call.1} parent=15 // pred_check_branch
          %234 = sbr.rel (%p232) target = $region24
        $region23: #{tpu_custom_call.1} parent=15 // pred_region
          %s235 = sand.u32 %s20, 1
          %s236 = scalar_lea.sflag [#allocation6], %s235
          %s237 = sand.u32 %s72, 1
          %s238 = smul.addr %s237, 8
          %s239 = scalar_lea.vmem [#allocation5], %s238
          %s241 = ssub.s32 128, 128
          %242 = vsyncadd %s236, %s241
          %s243 = sadd.s32 %s28, %s27
          %s244 = smul.addr %s243, 128
          %s245 = scalar_lea.hbm %s1, %s244
          %s247 = sshll.u32 %s239, 4
          %s248 = int_to_ptr.vmem [resolvable:$true] %s247
          %250 = dma.hbm_to_vmem [thread:$0]  %s245, 128, %s248, %s236
        $region24: #{tpu_custom_call.1} parent=15 // pred_fallthru
          _
        // Predicated region
        $region25: #{tpu_custom_call.1} parent=15 // pred_check
          %p251 = pneg %p108
        $region26: #{tpu_custom_call.1} parent=15 // pred_check_branch
          %253 = sbr.rel (%p251) target = $region28
        $region27: #{tpu_custom_call.1} parent=15 // pred_region
          %s254 = sand.u32 %s20, 1
          %s255 = scalar_lea.sflag [#allocation6], %s254
          %s256 = sand.u32 %s98, 1
          %s257 = smul.addr %s256, 8
          %s258 = scalar_lea.vmem [#allocation7], %s257
          %s260 = ssub.s32 128, 128
          %261 = vsyncadd %s255, %s260
          %s262 = smul.addr %s27, 128
          %s263 = scalar_lea.hbm %s2, %s262
          %s265 = sshll.u32 %s258, 4
          %s266 = int_to_ptr.vmem [resolvable:$true] %s265
          %268 = dma.hbm_to_vmem [thread:$0]  %s263, 128, %s266, %s255
        $region28: #{tpu_custom_call.1} parent=15 // pred_fallthru
          _
        // Predicated region
        $region29: #{tpu_custom_call.1} parent=15 // pred_check
          %p269 = pneg %p134
        $region30: #{tpu_custom_call.1} parent=15 // pred_check_branch
          %271 = sbr.rel (%p269) target = $region32
        $region31: #{tpu_custom_call.1} parent=15 // pred_region
          %s272 = sand.u32 %s20, 1
          %s273 = scalar_lea.sflag [#allocation9], %s272
          %s274 = sand.u32 %s124, 1
          %s275 = smul.addr %s274, 8
          %s276 = scalar_lea.vmem [#allocation8], %s275
          %s278 = ssub.s32 128, 128
          %279 = vsyncadd %s273, %s278
          %s280 = smul.addr %s27, 128
          %s281 = scalar_lea.hbm %s3, %s280
          %s283 = sshll.u32 %s276, 4
          %s284 = int_to_ptr.vmem [resolvable:$true] %s283
          %286 = dma.hbm_to_vmem [thread:$0]  %s281, 128, %s284, %s273
        $region32: #{tpu_custom_call.1} parent=15 // pred_fallthru
          _
        // Predicated region
        $region33: #{tpu_custom_call.1} parent=15 // pred_check
          %p287 = pneg %p162
        $region34: #{tpu_custom_call.1} parent=15 // pred_check_branch
          %289 = sbr.rel (%p287) target = $region36
        $region35: #{tpu_custom_call.1} parent=15 // pred_region
          %s290 = sand.u32 %s20, 1
          %s291 = scalar_lea.sflag [#allocation9], %s290
          %s292 = sand.u32 %s152, 1
          %s293 = smul.addr %s292, 8
          %s294 = scalar_lea.vmem [#allocation10], %s293
          %s296 = ssub.s32 128, 128
          %297 = vsyncadd %s291, %s296
          %s298 = sadd.s32 %s28, %s27
          %s299 = smul.addr %s298, 128
          %s300 = scalar_lea.hbm %s4, %s299
          %s302 = sshll.u32 %s294, 4
          %s303 = int_to_ptr.vmem [resolvable:$true] %s302
          %305 = dma.hbm_to_vmem [thread:$0]  %s300, 128, %s303, %s291
        $region36: #{tpu_custom_call.1} parent=15 // pred_fallthru
          _
      $region16: #{tpu_custom_call.1} parent=5 // pred_fallthru
        _
      %p306 = scmp.le.s32.totalorder 1, %s20
      %p307 = scmp.lt.s32.totalorder %s20, 3
      %p308 = pnand %p306, %p307
      %p309 = pneg %p308
      // Predicated region
      $region37: #{tpu_custom_call.1} parent=5 // pred_check
        _
      $region38: #{tpu_custom_call.1} parent=5 // pred_check_branch
        %311 = sbr.rel (%p308) target = $region40
      $region39: #{tpu_custom_call.1} parent=5 // pred_region
        %s312 = ssub.s32 %s20, 1
        %s313 = sand.u32 %s47, 1
        %s314 = scalar_lea.sflag [#allocation4], %s313
        %s315 = sand.u32 %s47, 1
        %s316 = smul.addr %s315, 8
        %s317 = scalar_lea.vmem [#allocation3], %s316
        // Predicated region
        $region41: #{tpu_custom_call.1} parent=39 // pred_check
          %p318 = pneg %p60
        $region42: #{tpu_custom_call.1} parent=39 // pred_check_branch
          %320 = sbr.rel (%p318) target = $region44
        $region43: #{tpu_custom_call.1} parent=39 // pred_region
          %321 = dma.done %s314, 128
        $region44: #{tpu_custom_call.1} parent=39 // pred_fallthru
          _
        %s322 = sand.u32 %s25, 1
        %s323 = scalar_lea.sflag [#allocation6], %s322
        %s324 = sand.u32 %s75, 1
        %s325 = smul.addr %s324, 8
        %s326 = scalar_lea.vmem [#allocation5], %s325
        // Predicated region
        $region45: #{tpu_custom_call.1} parent=39 // pred_check
          %p327 = pneg %p88
        $region46: #{tpu_custom_call.1} parent=39 // pred_check_branch
          %329 = sbr.rel (%p327) target = $region48
        $region47: #{tpu_custom_call.1} parent=39 // pred_region
          %330 = dma.done %s323, 128
        $region48: #{tpu_custom_call.1} parent=39 // pred_fallthru
          _
        %s331 = sand.u32 %s25, 1
        %s332 = scalar_lea.sflag [#allocation6], %s331
        %s333 = sand.u32 %s101, 1
        %s334 = smul.addr %s333, 8
        %s335 = scalar_lea.vmem [#allocation7], %s334
        // Predicated region
        $region49: #{tpu_custom_call.1} parent=39 // pred_check
          %p336 = pneg %p114
        $region50: #{tpu_custom_call.1} parent=39 // pred_check_branch
          %338 = sbr.rel (%p336) target = $region52
        $region51: #{tpu_custom_call.1} parent=39 // pred_region
          %339 = dma.done %s332, 128
        $region52: #{tpu_custom_call.1} parent=39 // pred_fallthru
          _
        %s340 = sand.u32 %s25, 1
        %s341 = scalar_lea.sflag [#allocation9], %s340
        %s342 = sand.u32 %s127, 1
        %s343 = smul.addr %s342, 8
        %s344 = scalar_lea.vmem [#allocation8], %s343
        // Predicated region
        $region53: #{tpu_custom_call.1} parent=39 // pred_check
          %p345 = pneg %p140
        $region54: #{tpu_custom_call.1} parent=39 // pred_check_branch
          %347 = sbr.rel (%p345) target = $region56
        $region55: #{tpu_custom_call.1} parent=39 // pred_region
          %348 = dma.done %s341, 128
        $region56: #{tpu_custom_call.1} parent=39 // pred_fallthru
          _
        %s349 = sand.u32 %s25, 1
        %s350 = scalar_lea.sflag [#allocation9], %s349
        %s351 = sand.u32 %s155, 1
        %s352 = smul.addr %s351, 8
        %s353 = scalar_lea.vmem [#allocation10], %s352
        // Predicated region
        $region57: #{tpu_custom_call.1} parent=39 // pred_check
          %p354 = pneg %p168
        $region58: #{tpu_custom_call.1} parent=39 // pred_check_branch
          %356 = sbr.rel (%p354) target = $region60
        $region59: #{tpu_custom_call.1} parent=39 // pred_region
          %357 = dma.done %s350, 128
        $region60: #{tpu_custom_call.1} parent=39 // pred_fallthru
          _
        %s358 = sand.u32 %s47, 1
        %s359 = scalar_lea.sflag [#allocation4], %s358
        %s360 = sand.u32 %s47, 1
        %s361 = smul.addr %s360, 8
        %s362 = scalar_lea.vmem [#allocation3], %s361
        %p363 = pneg %p60
        %p364 = pneg %p57
        %s365 = sand.u32 %s25, 1
        %s366 = scalar_lea.sflag [#allocation6], %s365
        %s367 = sand.u32 %s75, 1
        %s368 = smul.addr %s367, 8
        %s369 = scalar_lea.vmem [#allocation5], %s368
        %p370 = pneg %p88
        %p371 = pneg %p85
        %s372 = sand.u32 %s25, 1
        %s373 = scalar_lea.sflag [#allocation6], %s372
        %s374 = sand.u32 %s101, 1
        %s375 = smul.addr %s374, 8
        %s376 = scalar_lea.vmem [#allocation7], %s375
        %p377 = pneg %p114
        %p378 = pneg %p111
        %s379 = sand.u32 %s25, 1
        %s380 = scalar_lea.sflag [#allocation9], %s379
        %s381 = sand.u32 %s127, 1
        %s382 = smul.addr %s381, 8
        %s383 = scalar_lea.vmem [#allocation8], %s382
        %p384 = pneg %p140
        %p385 = pneg %p137
        %s386 = sand.u32 %s25, 1
        %s387 = scalar_lea.sflag [#allocation9], %s386
        %s388 = sand.u32 %s155, 1
        %s389 = smul.addr %s388, 8
        %s390 = scalar_lea.vmem [#allocation10], %s389
        %p391 = pneg %p168
        %p392 = pneg %p165
        %p393 = pneg %p194
        %p394 = pneg %p191
        %p395 = scmp.lt.s32.totalorder %s29, 1
        %s396 = scalar_select %p395, %s29, 1
        %s397 = scalar_lea.vmem %s5, %s396
        %p398 = scmp.lt.s32.totalorder %s29, 1
        %s399 = scalar_select %p398, %s29, 1
        %s400 = scalar_lea.vmem %s5, %s399
        %p401 = scmp.eq.s32.totalorder %s30, 0
        // Predicated region
        $region61: #{tpu_custom_call.1} parent=39 // pred_check
          %p402 = pneg %p401
        $region62: #{tpu_custom_call.1} parent=39 // pred_check_branch
          %404 = sbr.rel (%p402) target = $region64
        $region63: #{tpu_custom_call.1} parent=39 // pred_region
          %vm405 = vcmask 0
          %406 = vst.msk [vmem:[#allocation2] sm:$0x1] %vm405, 0.0
        $region64: #{tpu_custom_call.1} parent=39 // pred_fallthru
          _
        %v407 = vld [vmem:[%s317] sm:$0xff]
        %v408 = vld [vmem:[%s326] sm:$0xff]
        %v409 = vld [vmem:[%s335] sm:$0xff]
        %v410 = vld [vmem:[%s344] sm:$0xff]
        %v411 = vld [vmem:[%s353] sm:$0xff]
        %vm412 = vcmask 261120
        %v414 = vsel %vm412, %v407, 0
        %v417 = vsel %vm412, %v410, 0
        %419 = vmatprep.subr.mxu0 0.0
        %420 = vmatpush1.xpose.msra.mxu0 %v417
        %421 = vmatprep.subr.mxu0 0.0
        %422 = vmatpush1.xpose.msra.mxu0 0.0
        %423 = vmatprep.subr.mxu0 0.0
        %424 = vmatpush1.xpose.msra.mxu0 0.0
        %425 = vmatprep.subr.mxu0 0.0
        %426 = vmatpush1.xpose.msra.mxu0 0.0
        %427 = vmatprep.subr.mxu0 0.0
        %428 = vmatpush1.xpose.msra.mxu0 0.0
        %429 = vmatprep.subr.mxu0 0.0
        %430 = vmatpush1.xpose.msra.mxu0 0.0
        %431 = vmatprep.subr.mxu0 0.0
        %432 = vmatpush1.xpose.msra.mxu0 0.0
        %433 = vmatprep.subr.mxu0 0.0
        %434 = vmatpush1.xpose.msra.mxu0 0.0
        %435 = vmatprep.subr.mxu0 0.0
        %436 = vmatpush1.xpose.msra.mxu0 0.0
        %437 = vmatprep.subr.mxu0 0.0
        %438 = vmatpush1.xpose.msra.mxu0 0.0
        %439 = vmatprep.subr.mxu0 0.0
        %440 = vmatpush1.xpose.msra.mxu0 0.0
        %441 = vmatprep.subr.mxu0 0.0
        %442 = vmatpush1.xpose.msra.mxu0 0.0
        %443 = vmatprep.subr.mxu0 0.0
        %444 = vmatpush1.xpose.msra.mxu0 0.0
        %445 = vmatprep.subr.mxu0 0.0
        %446 = vmatpush1.xpose.msra.mxu0 0.0
        %447 = vmatprep.subr.mxu0 0.0
        %448 = vmatpush1.xpose.msra.mxu0 0.0
        %449 = vmatprep.subr.mxu0 0.0
        %450 = vmatpush1.xpose.msra.mxu0 0.0
        %451 = vmatprep.subr.mxu0 0.0
        %452 = vmatpush1.xpose.msra.mxu0 0.0
        %453 = vmatprep.subr.mxu0 0.0
        %454 = vmatpush1.xpose.msra.mxu0 0.0
        %455 = vmatprep.subr.mxu0 0.0
        %456 = vmatpush1.xpose.msra.mxu0 0.0
        %457 = vmatprep.subr.mxu0 0.0
        %458 = vmatpush1.xpose.msra.mxu0 0.0
        %459 = vmatprep.subr.mxu0 0.0
        %460 = vmatpush1.xpose.msra.mxu0 0.0
        %461 = vmatprep.subr.mxu0 0.0
        %462 = vmatpush1.xpose.msra.mxu0 0.0
        %463 = vmatprep.subr.mxu0 0.0
        %464 = vmatpush1.xpose.msra.mxu0 0.0
        %465 = vmatprep.subr.mxu0 0.0
        %466 = vmatpush1.xpose.msra.mxu0 0.0
        %467 = vmatprep.subr.mxu0 0.0
        %468 = vmatpush1.xpose.msra.mxu0 0.0
        %469 = vmatprep.subr.mxu0 0.0
        %470 = vmatpush1.xpose.msra.mxu0 0.0
        %471 = vmatprep.subr.mxu0 0.0
        %472 = vmatpush1.xpose.msra.mxu0 0.0
        %473 = vmatprep.subr.mxu0 0.0
        %474 = vmatpush1.xpose.msra.mxu0 0.0
        %475 = vmatprep.subr.mxu0 0.0
        %476 = vmatpush1.xpose.msra.mxu0 0.0
        %477 = vmatprep.subr.mxu0 0.0
        %478 = vmatpush1.xpose.msra.mxu0 0.0
        %479 = vmatprep.subr.mxu0 0.0
        %480 = vmatpush1.xpose.msra.mxu0 0.0
        %481 = vmatprep.subr.mxu0 0.0
        %482 = vmatpush1.xpose.msra.mxu0 0.0
        %483 = vmatprep.mubr.f32.mxu0 0.0
        %484 = vmatmul.mubr.f32.gmra.mrb[0].mxu0 %v414
        %v485 = vpop.f32.mrb[0].mxu0
        %v486 = vadd.f32 0.0, %v485
        %v487 = vpop.f32.mrb[0].mxu0
        %488 = vdwg.mxu0
        %v489 = vmul.f32 %v486, 2.65926
        %v491 = vsel %vm412, %v408, 0
        %v494 = vsel %vm412, %v409, 0
        %496 = vmatprep.subr.mxu0 0.0
        %497 = vmatpush1.xpose.msra.mxu0 %v494
        %498 = vmatprep.subr.mxu0 0.0
        %499 = vmatpush1.xpose.msra.mxu0 0.0
        %500 = vmatprep.subr.mxu0 0.0
        %501 = vmatpush1.xpose.msra.mxu0 0.0
        %502 = vmatprep.subr.mxu0 0.0
        %503 = vmatpush1.xpose.msra.mxu0 0.0
        %504 = vmatprep.subr.mxu0 0.0
        %505 = vmatpush1.xpose.msra.mxu0 0.0
        %506 = vmatprep.subr.mxu0 0.0
        %507 = vmatpush1.xpose.msra.mxu0 0.0
        %508 = vmatprep.subr.mxu0 0.0
        %509 = vmatpush1.xpose.msra.mxu0 0.0
        %510 = vmatprep.subr.mxu0 0.0
        %511 = vmatpush1.xpose.msra.mxu0 0.0
        %512 = vmatprep.subr.mxu0 0.0
        %513 = vmatpush1.xpose.msra.mxu0 0.0
        %514 = vmatprep.subr.mxu0 0.0
        %515 = vmatpush1.xpose.msra.mxu0 0.0
        %516 = vmatprep.subr.mxu0 0.0
        %517 = vmatpush1.xpose.msra.mxu0 0.0
        %518 = vmatprep.subr.mxu0 0.0
        %519 = vmatpush1.xpose.msra.mxu0 0.0
        %520 = vmatprep.subr.mxu0 0.0
        %521 = vmatpush1.xpose.msra.mxu0 0.0
        %522 = vmatprep.subr.mxu0 0.0
        %523 = vmatpush1.xpose.msra.mxu0 0.0
        %524 = vmatprep.subr.mxu0 0.0
        %525 = vmatpush1.xpose.msra.mxu0 0.0
        %526 = vmatprep.subr.mxu0 0.0
        %527 = vmatpush1.xpose.msra.mxu0 0.0
        %528 = vmatprep.subr.mxu0 0.0
        %529 = vmatpush1.xpose.msra.mxu0 0.0
        %530 = vmatprep.subr.mxu0 0.0
        %531 = vmatpush1.xpose.msra.mxu0 0.0
        %532 = vmatprep.subr.mxu0 0.0
        %533 = vmatpush1.xpose.msra.mxu0 0.0
        %534 = vmatprep.subr.mxu0 0.0
        %535 = vmatpush1.xpose.msra.mxu0 0.0
        %536 = vmatprep.subr.mxu0 0.0
        %537 = vmatpush1.xpose.msra.mxu0 0.0
        %538 = vmatprep.subr.mxu0 0.0
        %539 = vmatpush1.xpose.msra.mxu0 0.0
        %540 = vmatprep.subr.mxu0 0.0
        %541 = vmatpush1.xpose.msra.mxu0 0.0
        %542 = vmatprep.subr.mxu0 0.0
        %543 = vmatpush1.xpose.msra.mxu0 0.0
        %544 = vmatprep.subr.mxu0 0.0
        %545 = vmatpush1.xpose.msra.mxu0 0.0
        %546 = vmatprep.subr.mxu0 0.0
        %547 = vmatpush1.xpose.msra.mxu0 0.0
        %548 = vmatprep.subr.mxu0 0.0
        %549 = vmatpush1.xpose.msra.mxu0 0.0
        %550 = vmatprep.subr.mxu0 0.0
        %551 = vmatpush1.xpose.msra.mxu0 0.0
        %552 = vmatprep.subr.mxu0 0.0
        %553 = vmatpush1.xpose.msra.mxu0 0.0
        %554 = vmatprep.subr.mxu0 0.0
        %555 = vmatpush1.xpose.msra.mxu0 0.0
        %556 = vmatprep.subr.mxu0 0.0
        %557 = vmatpush1.xpose.msra.mxu0 0.0
        %558 = vmatprep.subr.mxu0 0.0
        %559 = vmatpush1.xpose.msra.mxu0 0.0
        %560 = vmatprep.mubr.f32.mxu0 0.0
        %561 = vmatmul.mubr.f32.gmra.mrb[0].mxu0 %v491
        %v562 = vpop.f32.mrb[0].mxu0
        %v563 = vadd.f32 0.0, %v562
        %v564 = vpop.f32.mrb[0].mxu0
        %565 = vdwg.mxu0
        %v566 = vmul.f32 %v563, 2.65926
        %vm567 = vcmp.gt.f32.partialorder %v411, 0.0
        %v568 = vsel %vm567, %v411, 1.0
        %v569 = vlog2.pop %v568
        %v570 = vmul.f32 %v569, 0.6931472
        %v571 = vmul.f32 %v411, %v570
        %v572 = vsel %vm567, %v571, 0.0
        %vm573 = vcmask 64512
        %v574 = vsel %vm573, %v572, 0.0
        %575 = vadd.xlane.f32.xlu0 %v574
        %v576 = vpop.xlane.xlu0 %575
        %v577 = vrot.slane %v576, 4
        %v578 = vadd.f32 %v576, %v577
        %v579 = vrot.slane %v578, 2
        %v580 = vadd.f32 %v578, %v579
        %v581 = vrot.slane %v580, 1
        %v582 = vadd.f32 %v580, %v581
        %s583 = vtos %v582
        %v584 = vstv %s583
        %v585 = vsel %vm573, %v411, 0.0
        %586 = vadd.xlane.f32.xlu0 %v585
        %v587 = vpop.xlane.xlu0 %586
        %v588 = vsel %vm573, %v489, -inf
        %589 = vmax.xlane.f32.xlu0 %v588
        %v590 = vpop.xlane.xlu0 %589
        %v591 = vsub.f32 %v489, %v590
        %v592 = vmul.f32 %v591, 1.442695
        %v593 = vpow.pop %v592
        %v594 = vsel %vm573, %v593, 0.0
        %595 = vadd.xlane.f32.xlu0 %v594
        %v596 = vpop.xlane.xlu0 %595
        %v597 = vlog2.pop %v596
        %v598 = vmul.f32 %v597, 0.6931472
        %v599 = vadd.f32 %v590, %v598
        %v600 = vsel %vm573, %v566, -inf
        %601 = vmax.xlane.f32.xlu0 %v600
        %v602 = vpop.xlane.xlu0 %601
        %v603 = vsub.f32 %v566, %v602
        %v604 = vmul.f32 %v603, 1.442695
        %v605 = vpow.pop %v604
        %v606 = vsel %vm573, %v605, 0.0
        %607 = vadd.xlane.f32.xlu0 %v606
        %v608 = vpop.xlane.xlu0 %607
        %v609 = vlog2.pop %v608
        %v610 = vmul.f32 %v609, 0.6931472
        %v611 = vadd.f32 %v602, %v610
        %v612 = vmul.f32 %v411, %v489
        %v613 = vsel %vm573, %v612, 0.0
        %614 = vadd.xlane.f32.xlu0 %v613
        %v615 = vpop.xlane.xlu0 %614
        %v616 = vrot.slane %v615, 4
        %v617 = vadd.f32 %v615, %v616
        %v618 = vrot.slane %v617, 2
        %v619 = vadd.f32 %v617, %v618
        %v620 = vrot.slane %v619, 1
        %v621 = vadd.f32 %v619, %v620
        %s622 = vtos %v621
        %v623 = vstv %s622
        %v624 = vmul.f32 %v411, %v566
        %v625 = vsel %vm573, %v624, 0.0
        %626 = vadd.xlane.f32.xlu0 %v625
        %v627 = vpop.xlane.xlu0 %626
        %v628 = vrot.slane %v627, 4
        %v629 = vadd.f32 %v627, %v628
        %v630 = vrot.slane %v629, 2
        %v631 = vadd.f32 %v629, %v630
        %v632 = vrot.slane %v631, 1
        %v633 = vadd.f32 %v631, %v632
        %s634 = vtos %v633
        %v635 = vstv %s634
        %v636 = vsub.f32 %v584, %v623
        %v637 = vmul.f32 %v587, %v599
        %vm638 = vcmask 7168
        %v639 = vsel %vm638, %v637, 0.0
        %640 = vadd.xlane.f32.xlu0 %v639
        %v641 = vpop.xlane.xlu0 %640
        %v642 = vrot.slane %v641, 4
        %v643 = vadd.f32 %v641, %v642
        %v644 = vrot.slane %v643, 2
        %v645 = vadd.f32 %v643, %v644
        %v646 = vrot.slane %v645, 1
        %v647 = vadd.f32 %v645, %v646
        %s648 = vtos %v647
        %v649 = vstv %s648
        %v650 = vadd.f32 %v636, %v649
        %v651 = vsub.f32 %v584, %v635
        %v652 = vmul.f32 %v587, %v611
        %v653 = vsel %vm638, %v652, 0.0
        %654 = vadd.xlane.f32.xlu0 %v653
        %v655 = vpop.xlane.xlu0 %654
        %v656 = vrot.slane %v655, 4
        %v657 = vadd.f32 %v655, %v656
        %v658 = vrot.slane %v657, 2
        %v659 = vadd.f32 %v657, %v658
        %v660 = vrot.slane %v659, 1
        %v661 = vadd.f32 %v659, %v660
        %s662 = vtos %v661
        %v663 = vstv %s662
        %v664 = vadd.f32 %v651, %v663
        %v665 = vld [vmem:[#allocation2] sm:$0x1]
        %v666 = vadd.f32 %v650, %v664
        %v667 = vadd.f32 %v665, %v666
        %vm668 = vcmask 0
        %669 = vst.msk [vmem:[#allocation2] sm:$0x1] %vm668, %v667
        // Predicated region
        $region65: #{tpu_custom_call.1} parent=39 // pred_check
          %p670 = pneg %p401
        $region66: #{tpu_custom_call.1} parent=39 // pred_check_branch
          %672 = sbr.rel (%p670) target = $region68
        $region67: #{tpu_custom_call.1} parent=39 // pred_region
          %v673 = vld [vmem:[#allocation2] sm:$0x1]
          %v674 = vmul.f32 %v673, 0.0625
          %675 = vst.msk [vmem:[%s400] sm:$0x1] %vm668, %v674
        $region68: #{tpu_custom_call.1} parent=39 // pred_fallthru
          _
        %p676 = scmp.lt.s32.totalorder %s29, 1
        %s677 = scalar_select %p676, %s29, 1
        %s678 = scalar_lea.vmem %s5, %s677
        // Predicated region
        $region69: #{tpu_custom_call.1} parent=39 // pred_check
          %p679 = pneg %p191
        $region70: #{tpu_custom_call.1} parent=39 // pred_check_branch
          %681 = sbr.rel (%p679) target = $region72
        $region71: #{tpu_custom_call.1} parent=39 // pred_region
          _
        $region72: #{tpu_custom_call.1} parent=39 // pred_fallthru
          _
      $region40: #{tpu_custom_call.1} parent=5 // pred_fallthru
        _
      %p682 = scmp.le.s32.totalorder 2, %s20
      // Predicated region
      $region73: #{tpu_custom_call.1} parent=5 // pred_check
        %p683 = pneg %p682
      $region74: #{tpu_custom_call.1} parent=5 // pred_check_branch
        %685 = sbr.rel (%p683) target = $region76
      $region75: #{tpu_custom_call.1} parent=5 // pred_region
        %s686 = ssub.s32 %s20, 2
        // Predicated region
        $region77: #{tpu_custom_call.1} parent=75 // pred_check
          %p687 = pneg %p197
        $region78: #{tpu_custom_call.1} parent=75 // pred_check_branch
          %689 = sbr.rel (%p687) target = $region80
        $region79: #{tpu_custom_call.1} parent=75 // pred_region
          %p690 = scmp.lt.s32.totalorder %s31, 1
          %s691 = scalar_select %p690, %s31, 1
          %s692 = scalar_lea.vmem %s5, %s691
        $region80: #{tpu_custom_call.1} parent=75 // pred_fallthru
          _
      $region76: #{tpu_custom_call.1} parent=5 // pred_fallthru
        _
    $region6: #{tpu_custom_call.1} parent=1 // loop_footer
      %s24 = sadd.s32 1, %s20
    $region7: #{tpu_custom_call.1} parent=1 // loop_footer_branch
      %19 = sbr.rel target = $region3
    $region8: #{tpu_custom_call.1} parent=1 // loop_exit
      _
    %693 = vsyncpa [#allocation4], 1
    %s694 = scalar_lea.sflag [#allocation4], 1
    %695 = vsyncpa %s694, 1
    %696 = vsyncpa [#allocation6], 1
    %s697 = scalar_lea.sflag [#allocation6], 1
    %698 = vsyncpa %s697, 1
    %699 = vsyncpa [#allocation9], 1
    %s700 = scalar_lea.sflag [#allocation9], 1
    %701 = vsyncpa %s700, 1

</llo_original>
